<compile_context>
chip_gen: v7x
topology: tpu7x:2x2x1
jax: 0.10.0
libtpu: 0.0.40
codegen_flags: <defaults>
</compile_context>

<pallas_src>
import jax
import jax.numpy as jnp
import numpy as np
from jax.experimental import pallas as pl
from jax.experimental.pallas import tpu as pltpu


def _required_kernel(output_size, kernel, stride):
    # mirrors Decoder._calcuate_required_kernel (with a guard against an infinite loop)
    while (output_size + stride - kernel) % stride != 0:
        kernel -= 1
        assert kernel >= 1, "no kernel size satisfies the stride constraint"
    return kernel


def _round_up(x, m):
    return ((x + m - 1) // m) * m


def decoder_kernel(x_ref, w_ref, b_ref, o_ref):
    # x_ref: (TM, L_in)  VMEM  -- squeezed single-channel input tile
    # w_ref: (L_in, TN)  VMEM  -- upsample folded into the banded conv-transpose matrix
    # b_ref: (1, 1)      SMEM  -- conv-transpose bias (scalar)
    # o_ref: (TM, TN)    VMEM
    y = jnp.dot(x_ref[...], w_ref[...], preferred_element_type=jnp.float32) + b_ref[0, 0]
    o_ref[...] = jnp.where(y >= 0.0, y, 0.01 * y)   # F.leaky_relu, default slope 0.01


def decoder_forward(x, weight, bias, output_size, deconv_kernel, deconv_stride):
    """x: (N, 1, L_in) float32. Returns (N, output_size, 1) float32."""
    n, c, l_in = x.shape
    assert c == 1, "Decoder's ConvTranspose1d has a single input channel"
    k = _required_kernel(output_size, deconv_kernel, deconv_stride)
    s = deconv_stride
    l_up = (output_size + s - k) // s

    # ---- tile / pad geometry: 8-aligned batch (sublanes), lane-dense 128-aligned output ----
    tm = 256 if n >= 256 else _round_up(n, 8)
    n_pad = _round_up(n, tm)
    out_128 = _round_up(output_size, 128)
    tn = min(out_128, 512)
    out_pad = _round_up(output_size, tn)

    # ---- fold nearest-upsample + ConvTranspose1d(1,1,k,stride=s) into one (L_in, out_pad) matrix ----
    # nearest upsample: src index for destination j is floor(j * L_in / L_up)
    j_idx = np.arange(l_up)
    src = (j_idx * l_in) // l_up                                   # (l_up,) static
    t_idx = np.arange(k)
    rows = np.repeat(src, k)                                       # (l_up*k,) static
    cols = (j_idx[:, None] * s + t_idx[None, :]).reshape(-1)       # (l_up*k,) static, < output_size
    vals = jnp.tile(jnp.asarray(weight, jnp.float32), l_up)        # (l_up*k,) traced
    # single fused scatter-add reproduces the overlapping "+=" accumulation of conv-transpose
    combined = jnp.zeros((l_in, out_pad), jnp.float32).at[rows, cols].add(vals)

    b_smem = jnp.asarray(bias, dtype=jnp.float32).reshape(1, 1)

    x2d = x.reshape(n, l_in).astype(jnp.float32)
    if n_pad != n:
        x2d = jnp.pad(x2d, ((0, n_pad - n), (0, 0)))

    grid = (n_pad // tm, out_pad // tn)
    out2d = pl.pallas_call(
        decoder_kernel,
        out_shape=jax.ShapeDtypeStruct((n_pad, out_pad), jnp.float32),
        grid=grid,
        in_specs=[
            pl.BlockSpec((tm, l_in), lambda i, j: (i, 0)),
            pl.BlockSpec((l_in, tn), lambda i, j: (0, j)),
            pl.BlockSpec(memory_space=pltpu.MemorySpace.SMEM),
        ],
        out_specs=pl.BlockSpec((tm, tn), lambda i, j: (i, j)),
        compiler_params=pltpu.CompilerParams(
            dimension_semantics=("parallel", "parallel")),
    )(x2d, combined, b_smem)

    # slice off batch/lane padding; trailing axis == PyTorch x.permute(0, 2, 1) of NCL output
    return out2d[:n, :output_size, None]


def _reference(x, weight, bias, output_size, deconv_kernel, deconv_stride):
    # pure-numpy reference of the PyTorch forward
    n, _, l_in = x.shape
    k = _required_kernel(output_size, deconv_kernel, deconv_stride)
    s = deconv_stride
    l_up = (output_size + s - k) // s
    src = (np.arange(l_up) * l_in) // l_up
    up = x[:, 0, src]                                   # (n, l_up) nearest upsample
    y = np.zeros((n, output_size), dtype=np.float64)
    for i in range(l_up):
        y[:, i * s:i * s + k] += up[:, i:i + 1] * weight[None, :]
    y += bias
    y = np.where(y >= 0, y, 0.01 * y)
    return y[:, :, None]                                # (n, output_size, 1)


if __name__ == "__main__":
    output_size, deconv_kernel, deconv_stride = 64, 8, 4
    n, l_in = 2, 16

    key = jax.random.PRNGKey(0)
    k1, k2, k3 = jax.random.split(key, 3)
    k_eff = _required_kernel(output_size, deconv_kernel, deconv_stride)

    x = jax.random.normal(k1, (n, 1, l_in), dtype=jnp.float32)
    weight = 0.1 * jax.random.normal(k2, (k_eff,), dtype=jnp.float32)   # ConvTranspose1d weight[0,0,:]
    bias = 0.1 * jax.random.normal(k3, (), dtype=jnp.float32)           # ConvTranspose1d bias[0]

    out = decoder_forward(x, weight, bias, output_size, deconv_kernel, deconv_stride)
    out = jax.block_until_ready(out)

    ref = _reference(np.asarray(x, dtype=np.float64), np.asarray(weight, dtype=np.float64),
                     float(bias), output_size, deconv_kernel, deconv_stride)
    assert out.shape == (n, output_size, 1)
    np.testing.assert_allclose(np.asarray(out, dtype=np.float64), ref, rtol=1e-5, atol=1e-5)
    print("KERNEL_OK")
</pallas_src>

<mosaic_0001>
module attributes {stable_mosaic.version = 11 : i64} {
  func.func @decoder_kernel(%arg0: i32, %arg1: i32, %arg2: memref<8x16xf32, #tpu.memory_space<vmem>>, %arg3: memref<16x128xf32, #tpu.memory_space<vmem>>, %arg4: memref<1x1xf32, #tpu.memory_space<smem>>, %arg5: memref<8x128xf32, #tpu.memory_space<vmem>>) attributes {dimension_semantics = [#tpu.dimension_semantics<parallel>, #tpu.dimension_semantics<parallel>], iteration_bounds = array<i64: 1, 1>, scalar_prefetch = 0 : i64, scratch_operands = 0 : i64, tpu.core_type = #tpu.core_type<tc>, window_params = [{transform_indices = @transform_0, window_bounds = array<i64: 8, 16>}, {transform_indices = @transform_1, window_bounds = array<i64: 16, 128>}, {transform_indices = @transform_2, window_bounds = array<i64: 1, 1>}, {transform_indices = @transform_3, window_bounds = array<i64: 8, 128>}]} {
    %c0 = arith.constant 0 : index
    %c0_0 = arith.constant 0 : index
    %0 = vector.load %arg2[%c0, %c0_0] : memref<8x16xf32, #tpu.memory_space<vmem>>, vector<8x16xf32>
    %c0_1 = arith.constant 0 : index
    %c0_2 = arith.constant 0 : index
    %1 = vector.load %arg3[%c0_1, %c0_2] : memref<16x128xf32, #tpu.memory_space<vmem>>, vector<16x128xf32>
    %cst = arith.constant dense<0.000000e+00> : vector<8x128xf32>
    %2 = tpu.matmul %0, %1, %cst {dimension_numbers = #tpu.dot_dimension_numbers<[1], [0], [0], [1], [0, 0, 1, 1], [], []>} : vector<8x16xf32>, vector<16x128xf32>, vector<8x128xf32> -> vector<8x128xf32>
    %c0_3 = arith.constant 0 : index
    %c0_4 = arith.constant 0 : index
    %3 = memref.load %arg4[%c0_3, %c0_4] : memref<1x1xf32, #tpu.memory_space<smem>>
    %4 = vector.broadcast %3 : f32 to vector<8x128xf32>
    %5 = arith.addf %2, %4 : vector<8x128xf32>
    %cst_5 = arith.constant 0.000000e+00 : f32
    %6 = vector.broadcast %cst_5 : f32 to vector<8x128xf32>
    %7 = arith.cmpf oge, %5, %6 : vector<8x128xf32>
    %cst_6 = arith.constant 0.00999999977 : f32
    %8 = vector.broadcast %cst_6 : f32 to vector<8x128xf32>
    %9 = arith.mulf %8, %5 : vector<8x128xf32>
    %10 = arith.select %7, %5, %9 : vector<8x128xi1>, vector<8x128xf32>
    %c0_7 = arith.constant 0 : index
    %c0_8 = arith.constant 0 : index
    %11 = vector.load %arg5[%c0_7, %c0_8] : memref<8x128xf32, #tpu.memory_space<vmem>>, vector<8x128xf32>
    tpu.vector_store %arg5[%c0_7, %c0_8], %10 {strides = array<i32>} : memref<8x128xf32, #tpu.memory_space<vmem>>, vector<8x128xf32>,
    return
  }
  func.func @transform_0(%arg0: i32, %arg1: i32) -> (i32, i32) {
    %c0_i32 = arith.constant 0 : i32
    %c0_i32_0 = arith.constant 0 : i32
    return %arg0, %c0_i32 : i32, i32
  }
  func.func @transform_1(%arg0: i32, %arg1: i32) -> (i32, i32) {
    %c0_i32 = arith.constant 0 : i32
    %c0_i32_0 = arith.constant 0 : i32
    return %c0_i32, %arg1 : i32, i32
  }
  func.func @transform_2(%arg0: i32, %arg1: i32) -> (i32, i32) {
    %c0_i32 = arith.constant 0 : i32
    %c0_i32_0 = arith.constant 0 : i32
    %c0_i32_1 = arith.constant 0 : i32
    return %c0_i32, %c0_i32_0 : i32, i32
  }
  func.func @transform_3(%arg0: i32, %arg1: i32) -> (i32, i32) {
    %c0_i32 = arith.constant 0 : i32
    return %arg0, %arg1 : i32, i32
  }
}

</mosaic_0001>

<llo_original>
// kernel: tpu_custom_call.1
$region0: #{tpu_custom_call.1}
  #allocation0 [shape = 'u32[]', space=smem, size = 0x4, offset = 0x4, fixed_abs, tag = 'smem constant byte address 0x4 - core index']
  #allocation1 [shape = 'u32[144,128]{1,0:T(1,128)}', space=vmem, size = 0x12000, scoped, tag = 'internal scratch']
  #allocation2 [shape = 'f32[1,1]{1,0:T(1,128)S(6)}', space=smem, size = 0x200, scoped, tag = 'scoped memory for tpu_custom_call.1']
  %s0 = inlined_call_operand.hbm [shape: f32[8,16], index: 0, kind: input, shape index: {}]
  %s1 = inlined_call_operand.hbm [shape: f32[16,128], index: 1, kind: input, shape index: {}]
  %s2 = inlined_call_operand.<no memory space> [shape: f32[1,1], index: 2, kind: input, shape index: {}]
  %s3 = inlined_call_operand.hbm [shape: f32[8,128], index: 3, kind: output, shape index: {}]
  %s4 = sld [smem:[#allocation0]]
  $region30: #{tpu_custom_call.1} parent=0
    _
  %s6 = ssub.s32 1, %s4
  %s7 = scalar_select 0, %s6, %s4
  %8 = sst [smem:[#allocation2]] %s2
  $region1: #{tpu_custom_call.1} parent=0
    #allocation3 [shape = 'u8[4096]{0}', space=vmem, size = 0x1000, scoped, tag = 'input window, operand 0, single buffered']
    #allocation4 [shape = 's32[1]{0}', space=sflag, size = 0x4, scoped, tag = 'scoped memory for tpu_custom_call.1']
    #allocation5 [shape = 's32[1]{0}', space=sflag, size = 0x4, scoped, tag = 'scoped memory for tpu_custom_call.1']
    #allocation6 [shape = 'u8[8192]{0}', space=vmem, size = 0x2000, scoped, tag = 'input window, operand 1, single buffered']
    #allocation7 [shape = 's32[1]{0}', space=sflag, size = 0x4, scoped, tag = 'scoped memory for tpu_custom_call.1']
    #allocation8 [shape = 'u8[4096]{0}', space=vmem, size = 0x1000, scoped, tag = 'output window, operand 0, single buffered']
    %9 = vsyncpa [#allocation4], 0
    %10 = vsyncpa [#allocation7], 0
    %11 = vsyncpa [#allocation5], 0
    // Predicated region
    $region2: #{tpu_custom_call.1} parent=1 // pred_check
      _
    $region3: #{tpu_custom_call.1} parent=1 // pred_check_branch
      %13 = sbr.rel (0) target = $region5
    $region4: #{tpu_custom_call.1} parent=1 // pred_region
      %s15 = ssub.s32 128, 128
      %16 = vsyncadd [#allocation4], %s15
      %s18 = sshll.u32 [#allocation3], 4
      %s19 = int_to_ptr.vmem [resolvable:$true] %s18
      %21 = dma.hbm_to_vmem [thread:$0]  %s0, 128, %s19, [#allocation4]
    $region5: #{tpu_custom_call.1} parent=1 // pred_fallthru
      _
    // Predicated region
    $region6: #{tpu_custom_call.1} parent=1 // pred_check
      _
    $region7: #{tpu_custom_call.1} parent=1 // pred_check_branch
      %23 = sbr.rel (0) target = $region9
    $region8: #{tpu_custom_call.1} parent=1 // pred_region
      %s25 = ssub.s32 256, 256
      %26 = vsyncadd [#allocation7], %s25
      %s27 = sshll.u32 [#allocation6], 4
      %s28 = int_to_ptr.vmem [resolvable:$true] %s27
      %33 = dma.hbm_to_vmem [thread:$0]  %s1, 256, %s28, [#allocation7], 128, 128, 8
    $region9: #{tpu_custom_call.1} parent=1 // pred_fallthru
      _
    // Predicated region
    $region10: #{tpu_custom_call.1} parent=1 // pred_check
      _
    $region11: #{tpu_custom_call.1} parent=1 // pred_check_branch
      %35 = sbr.rel (0) target = $region13
    $region12: #{tpu_custom_call.1} parent=1 // pred_region
      _
    $region13: #{tpu_custom_call.1} parent=1 // pred_fallthru
      _
    // Predicated region
    $region14: #{tpu_custom_call.1} parent=1 // pred_check
      _
    $region15: #{tpu_custom_call.1} parent=1 // pred_check_branch
      %37 = sbr.rel (0) target = $region17
    $region16: #{tpu_custom_call.1} parent=1 // pred_region
      %38 = dma.done [#allocation4], 128
    $region17: #{tpu_custom_call.1} parent=1 // pred_fallthru
      _
    // Predicated region
    $region18: #{tpu_custom_call.1} parent=1 // pred_check
      _
    $region19: #{tpu_custom_call.1} parent=1 // pred_check_branch
      %40 = sbr.rel (0) target = $region21
    $region20: #{tpu_custom_call.1} parent=1 // pred_region
      %41 = dma.done [#allocation7], 256
    $region21: #{tpu_custom_call.1} parent=1 // pred_fallthru
      _
    %v42 = vld [vmem:[#allocation3] sm:$0xff]
    %v43 = vld [vmem:[#allocation6] sm:$0xff]
    %v44 = vld [vmem:[#allocation6 + $0x8] sm:$0xff]
    %s45 = sld [smem:[#allocation2]]
    %v46 = vstv %s45
    %vm47 = vcmask 130048
    %v49 = vsel %vm47, %v42, 0
    %51 = vmatprep.subr.mxu0 0.0
    %52 = vmatpush1.msra.mxu0 %v43
    %53 = vmatprep.subr.mxu0 0.0
    %54 = vmatpush1.msra.mxu0 %v44
    %55 = vmatprep.subr.mxu0 0.0
    %56 = vmatpush1.msra.mxu0 0.0
    %57 = vmatprep.subr.mxu0 0.0
    %58 = vmatpush1.msra.mxu0 0.0
    %59 = vmatprep.subr.mxu0 0.0
    %60 = vmatpush1.msra.mxu0 0.0
    %61 = vmatprep.subr.mxu0 0.0
    %62 = vmatpush1.msra.mxu0 0.0
    %63 = vmatprep.subr.mxu0 0.0
    %64 = vmatpush1.msra.mxu0 0.0
    %65 = vmatprep.subr.mxu0 0.0
    %66 = vmatpush1.msra.mxu0 0.0
    %67 = vmatprep.subr.mxu0 0.0
    %68 = vmatpush1.msra.mxu0 0.0
    %69 = vmatprep.subr.mxu0 0.0
    %70 = vmatpush1.msra.mxu0 0.0
    %71 = vmatprep.subr.mxu0 0.0
    %72 = vmatpush1.msra.mxu0 0.0
    %73 = vmatprep.subr.mxu0 0.0
    %74 = vmatpush1.msra.mxu0 0.0
    %75 = vmatprep.subr.mxu0 0.0
    %76 = vmatpush1.msra.mxu0 0.0
    %77 = vmatprep.subr.mxu0 0.0
    %78 = vmatpush1.msra.mxu0 0.0
    %79 = vmatprep.subr.mxu0 0.0
    %80 = vmatpush1.msra.mxu0 0.0
    %81 = vmatprep.subr.mxu0 0.0
    %82 = vmatpush1.msra.mxu0 0.0
    %83 = vmatprep.subr.mxu0 0.0
    %84 = vmatpush1.msra.mxu0 0.0
    %85 = vmatprep.subr.mxu0 0.0
    %86 = vmatpush1.msra.mxu0 0.0
    %87 = vmatprep.subr.mxu0 0.0
    %88 = vmatpush1.msra.mxu0 0.0
    %89 = vmatprep.subr.mxu0 0.0
    %90 = vmatpush1.msra.mxu0 0.0
    %91 = vmatprep.subr.mxu0 0.0
    %92 = vmatpush1.msra.mxu0 0.0
    %93 = vmatprep.subr.mxu0 0.0
    %94 = vmatpush1.msra.mxu0 0.0
    %95 = vmatprep.subr.mxu0 0.0
    %96 = vmatpush1.msra.mxu0 0.0
    %97 = vmatprep.subr.mxu0 0.0
    %98 = vmatpush1.msra.mxu0 0.0
    %99 = vmatprep.subr.mxu0 0.0
    %100 = vmatpush1.msra.mxu0 0.0
    %101 = vmatprep.subr.mxu0 0.0
    %102 = vmatpush1.msra.mxu0 0.0
    %103 = vmatprep.subr.mxu0 0.0
    %104 = vmatpush1.msra.mxu0 0.0
    %105 = vmatprep.subr.mxu0 0.0
    %106 = vmatpush1.msra.mxu0 0.0
    %107 = vmatprep.subr.mxu0 0.0
    %108 = vmatpush1.msra.mxu0 0.0
    %109 = vmatprep.subr.mxu0 0.0
    %110 = vmatpush1.msra.mxu0 0.0
    %111 = vmatprep.subr.mxu0 0.0
    %112 = vmatpush1.msra.mxu0 0.0
    %113 = vmatprep.subr.mxu0 0.0
    %114 = vmatpush1.msra.mxu0 0.0
    %115 = vmatprep.mubr.f32.mxu0 0.0
    %116 = vmatmul.mubr.f32.gmra.mrb[0].mxu0 %v49
    %v117 = vpop.f32.mrb[0].mxu0
    %v118 = vadd.f32 %v46, %v117
    %v119 = vpop.f32.mrb[0].mxu0
    %120 = vdwg.mxu0
    %vm121 = vcmp.ge.f32.partialorder %v118, 0.0
    %v122 = vmul.f32 %v118, 0.01
    %v123 = vsel %vm121, %v118, %v122
    %124 = vst [vmem:[#allocation8] sm:$0xff] %v123
    // Predicated region
    $region22: #{tpu_custom_call.1} parent=1 // pred_check
      _
    $region23: #{tpu_custom_call.1} parent=1 // pred_check_branch
      %126 = sbr.rel (0) target = $region25
    $region24: #{tpu_custom_call.1} parent=1 // pred_region
      %s128 = ssub.s32 128, 128
      %129 = vsyncadd [#allocation5], %s128
      %s131 = sshll.u32 [#allocation8], 4
      %s132 = int_to_ptr.vmem [resolvable:$true] %s131
      %134 = dma.vmem_to_hbm [thread:$0]  %s132, 128, %s3, [#allocation5]
    $region25: #{tpu_custom_call.1} parent=1 // pred_fallthru
      _
    // Predicated region
    $region26: #{tpu_custom_call.1} parent=1 // pred_check
      _
    $region27: #{tpu_custom_call.1} parent=1 // pred_check_branch
      %136 = sbr.rel (0) target = $region29
    $region28: #{tpu_custom_call.1} parent=1 // pred_region
      %137 = dma.done [#allocation5], 128
    $region29: #{tpu_custom_call.1} parent=1 // pred_fallthru
      _
    %138 = vsyncpa [#allocation4], 1
    %139 = vsyncpa [#allocation7], 1
    %140 = vsyncpa [#allocation5], 1

</llo_original>
